<compile_context>
chip_gen: v5e
topology: v5e:2x2
jax: 0.10.0
libtpu: 0.0.40
codegen_flags: <defaults>
</compile_context>

<pallas_src>
import jax
import jax.numpy as jnp
from jax.experimental import pallas as pl
from jax.experimental.pallas import tpu as pltpu


def _linear_relu_kernel(x_ref, w_ref, o_ref, acc_ref):
    # x_ref: (tm, tk), w_ref: (tk, tn)  -- weight already in [K, N] layout, so
    # this is the MXU-native contraction (no transpose needed anywhere).
    k = pl.program_id(2)

    partial = jnp.dot(x_ref[...], w_ref[...], preferred_element_type=jnp.float32)

    # First K step: write directly (saves a zero-fill + accumulator read).
    @pl.when(k == 0)
    def _():
        acc_ref[...] = partial

    @pl.when(k > 0)
    def _():
        acc_ref[...] += partial

    # ReLU fused only into the final-K epilogue (clamping partial sums would
    # be wrong).
    @pl.when(k == pl.num_programs(2) - 1)
    def _():
        o_ref[...] = jnp.maximum(acc_ref[...], 0.0).astype(o_ref.dtype)


def _round_up(x, m):
    return ((x + m - 1) // m) * m


def _pad_to(a, target_shape):
    pads = [(0, t - s) for s, t in zip(a.shape, target_shape)]
    if any(p[1] for p in pads):
        return jnp.pad(a, pads)  # no-op copy avoided when already aligned
    return a


def linear_relu(x, w, *, tm=None, tn=None, tk=None, use_bf16=True):
    """x: [B, K] float32, w: [N, K] float32 (torch nn.Linear weight layout)."""
    B, K = x.shape
    N, K2 = w.shape
    assert K == K2, (K, K2)
    out_dtype = x.dtype

    # MXU operand dtype (accumulation stays f32 regardless).
    op_dtype = jnp.bfloat16 if use_bf16 else x.dtype
    op_bytes = 2 if use_bf16 else 4
    m_align = 16 if use_bf16 else 8  # sublane multiple for the operand dtype

    # Adaptive tiles: don't over-pad a small batch, but grow N/K tiles up to
    # 512 so grid-step overhead is amortized and the MXU stays full.
    if tm is None:
        tm = min(_round_up(B, m_align), 512)
    if tn is None:
        tn = min(_round_up(N, 128), 512)
    if tk is None:
        tk = min(_round_up(K, 128), 512)

    # Pad up to tile multiples (lane-dense last dims; zero K-padding is exact).
    Bp = _round_up(B, tm)
    Np = _round_up(N, tn)
    Kp = _round_up(K, tk)

    x_p = _pad_to(x.astype(op_dtype), (Bp, Kp))
    # One-time weight transpose to [K, N] (amortized across all M tiles).
    w_t = _pad_to(w.astype(op_dtype).T, (Kp, Np))

    grid = (Bp // tm, Np // tn, Kp // tk)

    # Double-buffered inputs + double-buffered output + f32 accumulator.
    vmem_needed = (2 * (tm * tk + tk * tn) * op_bytes
                   + 2 * tm * tn * 4
                   + tm * tn * 4)
    # Give headroom but stay under the v7x (64 MiB physical) ceiling.
    vmem_limit = int(min(max(2 * vmem_needed, 32 * 1024 * 1024),
                         48 * 1024 * 1024))

    out_p = pl.pallas_call(
        _linear_relu_kernel,
        out_shape=jax.ShapeDtypeStruct((Bp, Np), out_dtype),
        grid_spec=pltpu.PrefetchScalarGridSpec(
            num_scalar_prefetch=0,
            grid=grid,
            in_specs=[
                # x tile: (tm, tk) indexed by (i, k)
                pl.BlockSpec((tm, tk), lambda i, j, k: (i, k)),
                # w tile ([K, N] layout): (tk, tn) indexed by (k, j)
                # (sweep pipeline_mode=pl.Buffered(3) here if the W DMA shows
                #  up exposed at very small batch)
                pl.BlockSpec((tk, tn), lambda i, j, k: (k, j)),
            ],
            # Output tile stays resident across the K axis; written only on
            # the last K step from the f32 accumulator.
            out_specs=pl.BlockSpec((tm, tn), lambda i, j, k: (i, j)),
            scratch_shapes=[pltpu.VMEM((tm, tn), jnp.float32)],
        ),
        compiler_params=pltpu.CompilerParams(
            # M/N shard across cores (v7x 2-TC megacore); K is the reduction.
            dimension_semantics=("parallel", "parallel", "arbitrary"),
            vmem_limit_bytes=vmem_limit,
        ),
    )(x_p, w_t)

    # Slice away the padding.
    if (Bp, Np) != (B, N):
        out_p = out_p[:B, :N]
    return out_p


if __name__ == "__main__":
    # Small shapes consistent with LinearModel(k, n): batch=8, k=32, n=16.
    B, K, N = 8, 32, 16

    key = jax.random.PRNGKey(0)
    kx, kw = jax.random.split(key)
    x = jax.random.normal(kx, (B, K), dtype=jnp.float32)
    # Deterministic synthetic weight in nn.Linear layout [n, k].
    bound = 1.0 / (K ** 0.5)
    w = jax.random.uniform(kw, (N, K), dtype=jnp.float32, minval=-bound, maxval=bound)

    out = linear_relu(x, w)
    out = jax.block_until_ready(out)

    # Correctness check against plain-JAX f32 reference relu(x @ W^T).
    # Tolerance is loosened because MXU operands are cast to bf16 (f32 accum).
    ref = jnp.maximum(x @ w.T, 0.0)
    assert out.shape == (B, N)
    assert jnp.allclose(out, ref, atol=2e-2, rtol=2e-2), float(
        jnp.max(jnp.abs(out - ref)))

    print("KERNEL_OK")
</pallas_src>

<mosaic_0001>
module attributes {stable_mosaic.version = 11 : i64} {
  func.func @_linear_relu_kernel(%arg0: i32, %arg1: i32, %arg2: i32, %arg3: memref<16x128xbf16, #tpu.memory_space<vmem>>, %arg4: memref<128x128xbf16, #tpu.memory_space<vmem>>, %arg5: memref<16x128xf32, #tpu.memory_space<vmem>>, %arg6: memref<16x128xf32, #tpu.memory_space<vmem>>) attributes {dimension_semantics = [#tpu.dimension_semantics<parallel>, #tpu.dimension_semantics<parallel>, #tpu.dimension_semantics<arbitrary>], iteration_bounds = array<i64: 1, 1, 1>, scalar_prefetch = 0 : i64, scratch_operands = 1 : i64, tpu.core_type = #tpu.core_type<tc>, window_params = [{transform_indices = @transform_0, window_bounds = array<i64: 16, 128>}, {transform_indices = @transform_1, window_bounds = array<i64: 128, 128>}, {transform_indices = @transform_2, window_bounds = array<i64: 16, 128>}]} {
    %c0 = arith.constant 0 : index
    %c0_0 = arith.constant 0 : index
    %0 = vector.load %arg3[%c0, %c0_0] : memref<16x128xbf16, #tpu.memory_space<vmem>>, vector<16x128xbf16>
    %c0_1 = arith.constant 0 : index
    %c0_2 = arith.constant 0 : index
    %1 = vector.load %arg4[%c0_1, %c0_2] : memref<128x128xbf16, #tpu.memory_space<vmem>>, vector<128x128xbf16>
    %cst = arith.constant dense<0.000000e+00> : vector<16x128xf32>
    %2 = tpu.matmul %0, %1, %cst {dimension_numbers = #tpu.dot_dimension_numbers<[1], [0], [0], [1], [0, 0, 1, 1], [], []>} : vector<16x128xbf16>, vector<128x128xbf16>, vector<16x128xf32> -> vector<16x128xf32>
    %c0_i32 = arith.constant 0 : i32
    %3 = arith.cmpi eq, %arg2, %c0_i32 : i32
    %4 = arith.extui %3 : i1 to i32
    %c0_i32_3 = arith.constant 0 : i32
    %5 = arith.cmpi ne, %4, %c0_i32_3 : i32
    scf.if %5 {
      %c0_8 = arith.constant 0 : index
      %c0_9 = arith.constant 0 : index
      %12 = vector.load %arg6[%c0_8, %c0_9] : memref<16x128xf32, #tpu.memory_space<vmem>>, vector<16x128xf32>
      tpu.vector_store %arg6[%c0_8, %c0_9], %2 {strides = array<i32>} : memref<16x128xf32, #tpu.memory_space<vmem>>, vector<16x128xf32>,
    } else {
    }
    %c0_i32_4 = arith.constant 0 : i32
    %6 = arith.cmpi sgt, %arg2, %c0_i32_4 : i32
    %7 = arith.extui %6 : i1 to i32
    %c0_i32_5 = arith.constant 0 : i32
    %8 = arith.cmpi ne, %7, %c0_i32_5 : i32
    scf.if %8 {
      %c0_8 = arith.constant 0 : index
      %c0_9 = arith.constant 0 : index
      %12 = vector.load %arg6[%c0_8, %c0_9] : memref<16x128xf32, #tpu.memory_space<vmem>>, vector<16x128xf32>
      %13 = arith.addf %12, %2 : vector<16x128xf32>
      %c0_10 = arith.constant 0 : index
      %c0_11 = arith.constant 0 : index
      %14 = vector.load %arg6[%c0_10, %c0_11] : memref<16x128xf32, #tpu.memory_space<vmem>>, vector<16x128xf32>
      tpu.vector_store %arg6[%c0_10, %c0_11], %13 {strides = array<i32>} : memref<16x128xf32, #tpu.memory_space<vmem>>, vector<16x128xf32>,
    } else {
    }
    %c0_i32_6 = arith.constant 0 : i32
    %9 = arith.cmpi eq, %arg2, %c0_i32_6 : i32
    %10 = arith.extui %9 : i1 to i32
    %c0_i32_7 = arith.constant 0 : i32
    %11 = arith.cmpi ne, %10, %c0_i32_7 : i32
    scf.if %11 {
      %c0_8 = arith.constant 0 : index
      %c0_9 = arith.constant 0 : index
      %12 = vector.load %arg6[%c0_8, %c0_9] : memref<16x128xf32, #tpu.memory_space<vmem>>, vector<16x128xf32>
      %cst_10 = arith.constant 0.000000e+00 : f32
      %13 = vector.broadcast %cst_10 : f32 to vector<16x128xf32>
      %14 = arith.maximumf %12, %13 : vector<16x128xf32>
      %c0_11 = arith.constant 0 : index
      %c0_12 = arith.constant 0 : index
      %15 = vector.load %arg5[%c0_11, %c0_12] : memref<16x128xf32, #tpu.memory_space<vmem>>, vector<16x128xf32>
      tpu.vector_store %arg5[%c0_11, %c0_12], %14 {strides = array<i32>} : memref<16x128xf32, #tpu.memory_space<vmem>>, vector<16x128xf32>,
    } else {
    }
    return
  }
  func.func @transform_0(%arg0: i32, %arg1: i32, %arg2: i32) -> (i32, i32) {
    %c0_i32 = arith.constant 0 : i32
    return %arg0, %arg2 : i32, i32
  }
  func.func @transform_1(%arg0: i32, %arg1: i32, %arg2: i32) -> (i32, i32) {
    %c0_i32 = arith.constant 0 : i32
    return %arg2, %arg1 : i32, i32
  }
  func.func @transform_2(%arg0: i32, %arg1: i32, %arg2: i32) -> (i32, i32) {
    %c0_i32 = arith.constant 0 : i32
    return %arg0, %arg1 : i32, i32
  }
}

</mosaic_0001>

<llo_original>
// kernel: tpu_custom_call.1
$region0: #{tpu_custom_call.1}
  #allocation0 [shape = 'u32[]', space=smem, size = 0x4, offset = 0x4, fixed_abs, tag = 'smem constant byte address 0x4 - core index']
  #allocation1 [shape = 'u32[72,128]{1,0:T(1,128)}', space=vmem, size = 0x9000, scoped, tag = 'internal scratch']
  #allocation2 [shape = 'f32[16,128]{1,0:T(8,128)}', space=vmem, size = 0x2000, scoped, tag = 'scratch operand']
  %s0 = inlined_call_operand.hbm [shape: bf16[16,128], index: 0, kind: input, shape index: {}]
  %s1 = inlined_call_operand.hbm [shape: bf16[128,128], index: 1, kind: input, shape index: {}]
  %s2 = inlined_call_operand.hbm [shape: f32[16,128], index: 2, kind: output, shape index: {}]
  %s3 = sld [smem:[#allocation0]]
  $region38: #{tpu_custom_call.1} parent=0
    _
  %s5 = ssub.s32 1, %s3
  %s6 = scalar_select 0, %s5, %s3
  $region1: #{tpu_custom_call.1} parent=0
    #allocation3 [shape = 'u8[4096]{0}', space=vmem, size = 0x1000, scoped, tag = 'input window, operand 0, single buffered']
    #allocation4 [shape = 's32[1]{0}', space=sflag, size = 0x4, scoped, tag = 'scoped memory for tpu_custom_call.1']
    #allocation5 [shape = 's32[1]{0}', space=sflag, size = 0x4, scoped, tag = 'scoped memory for tpu_custom_call.1']
    #allocation6 [shape = 'u8[32768]{0}', space=vmem, size = 0x8000, scoped, tag = 'input window, operand 1, single buffered']
    #allocation7 [shape = 's32[1]{0}', space=sflag, size = 0x4, scoped, tag = 'scoped memory for tpu_custom_call.1']
    #allocation8 [shape = 'u8[8192]{0}', space=vmem, size = 0x2000, scoped, tag = 'output window, operand 0, single buffered']
    %7 = vsyncpa [#allocation4], 0
    %8 = vsyncpa [#allocation7], 0
    %9 = vsyncpa [#allocation5], 0
    // Predicated region
    $region2: #{tpu_custom_call.1} parent=1 // pred_check
      _
    $region3: #{tpu_custom_call.1} parent=1 // pred_check_branch
      %11 = sbr.rel (0) target = $region5
    $region4: #{tpu_custom_call.1} parent=1 // pred_region
      %13 = vsyncadd [#allocation4], 0
      %s14 = sshll.u32 %s0, 4
      %s15 = int_to_ptr.hbm [resolvable:$true] %s14
      %s16 = sshll.u32 [#allocation3], 4
      %s17 = int_to_ptr.vmem [resolvable:$true] %s16
      %22 = dma.hbm_to_vmem [thread:$0]  %s15, 128, %s17, [#allocation4], 64, 64, 4
    $region5: #{tpu_custom_call.1} parent=1 // pred_fallthru
      _
    // Predicated region
    $region6: #{tpu_custom_call.1} parent=1 // pred_check
      _
    $region7: #{tpu_custom_call.1} parent=1 // pred_check_branch
      %24 = sbr.rel (0) target = $region9
    $region8: #{tpu_custom_call.1} parent=1 // pred_region
      %26 = vsyncadd [#allocation7], 0
      %s27 = sshll.u32 %s1, 4
      %s28 = int_to_ptr.hbm [resolvable:$true] %s27
      %s29 = sshll.u32 [#allocation6], 4
      %s30 = int_to_ptr.vmem [resolvable:$true] %s29
      %35 = dma.hbm_to_vmem [thread:$0]  %s28, 1024, %s30, [#allocation7], 64, 64, 4
    $region9: #{tpu_custom_call.1} parent=1 // pred_fallthru
      _
    // Predicated region
    $region10: #{tpu_custom_call.1} parent=1 // pred_check
      _
    $region11: #{tpu_custom_call.1} parent=1 // pred_check_branch
      %37 = sbr.rel (0) target = $region13
    $region12: #{tpu_custom_call.1} parent=1 // pred_region
      %39 = dma.done [#allocation4], 128
    $region13: #{tpu_custom_call.1} parent=1 // pred_fallthru
      _
    // Predicated region
    $region14: #{tpu_custom_call.1} parent=1 // pred_check
      _
    $region15: #{tpu_custom_call.1} parent=1 // pred_check_branch
      %41 = sbr.rel (0) target = $region17
    $region16: #{tpu_custom_call.1} parent=1 // pred_region
      %43 = dma.done [#allocation7], 1024
    $region17: #{tpu_custom_call.1} parent=1 // pred_fallthru
      _
    %v44 = vld [vmem:[#allocation3] sm:$0xf]
    %v45 = vld [vmem:[#allocation3 + $0x4] sm:$0xf]
    %v46 = vld [vmem:[#allocation6] sm:$0xf]
    %v47 = vld [vmem:[#allocation6 + $0x4] sm:$0xf]
    %v48 = vld [vmem:[#allocation6 + $0x8] sm:$0xf]
    %v49 = vld [vmem:[#allocation6 + $0xc] sm:$0xf]
    %v50 = vld [vmem:[#allocation6 + $0x10] sm:$0xf]
    %v51 = vld [vmem:[#allocation6 + $0x14] sm:$0xf]
    %v52 = vld [vmem:[#allocation6 + $0x18] sm:$0xf]
    %v53 = vld [vmem:[#allocation6 + $0x1c] sm:$0xf]
    %v54 = vld [vmem:[#allocation6 + $0x20] sm:$0xf]
    %v55 = vld [vmem:[#allocation6 + $0x24] sm:$0xf]
    %v56 = vld [vmem:[#allocation6 + $0x28] sm:$0xf]
    %v57 = vld [vmem:[#allocation6 + $0x2c] sm:$0xf]
    %v58 = vld [vmem:[#allocation6 + $0x30] sm:$0xf]
    %v59 = vld [vmem:[#allocation6 + $0x34] sm:$0xf]
    %v60 = vld [vmem:[#allocation6 + $0x38] sm:$0xf]
    %v61 = vld [vmem:[#allocation6 + $0x3c] sm:$0xf]
    %v64 = vunpack.c.l.b16 %v44
    %v65 = vunpack.c.l.b16 %v45
    %v66 = vpack.c.b16 %v65, %v64
    %v84 = vunpack.c.l.b16 %v46
    %v85 = vunpack.c.l.b16 %v47
    %v86 = vunpack.c.l.b16 %v48
    %v87 = vunpack.c.l.b16 %v49
    %v88 = vunpack.c.l.b16 %v50
    %v89 = vunpack.c.l.b16 %v51
    %v90 = vunpack.c.l.b16 %v52
    %v91 = vunpack.c.l.b16 %v53
    %v92 = vunpack.c.l.b16 %v54
    %v93 = vunpack.c.l.b16 %v55
    %v94 = vunpack.c.l.b16 %v56
    %v95 = vunpack.c.l.b16 %v57
    %v96 = vunpack.c.l.b16 %v58
    %v97 = vunpack.c.l.b16 %v59
    %v98 = vunpack.c.l.b16 %v60
    %v99 = vunpack.c.l.b16 %v61
    %v100 = vpack.c.b16 %v85, %v84
    %v101 = vpack.c.b16 %v87, %v86
    %v102 = vpack.c.b16 %v89, %v88
    %v103 = vpack.c.b16 %v91, %v90
    %v104 = vpack.c.b16 %v93, %v92
    %v105 = vpack.c.b16 %v95, %v94
    %v106 = vpack.c.b16 %v97, %v96
    %v107 = vpack.c.b16 %v99, %v98
    %116 = vmatpush.bf16.msra.mxu0 %v107
    %117 = vmatpush.bf16.msra.mxu0 %v106
    %118 = vmatpush.bf16.msra.mxu0 %v105
    %119 = vmatpush.bf16.msra.mxu0 %v104
    %120 = vmatpush.bf16.msra.mxu0 %v103
    %121 = vmatpush.bf16.msra.mxu0 %v102
    %122 = vmatpush.bf16.msra.mxu0 %v101
    %123 = vmatpush.bf16.msra.mxu0 %v100
    %124 = vmatmul.bf16.gmra.mxu0 %v66
    %v125 = vpop.f32.mrf.mxu0
    %v126 = vadd.f32 0.0, %v125
    %v127 = vpop.f32.mrf.mxu0
    %v128 = vadd.f32 0.0, %v127
    %129 = vdwg.mxu0
    %p130 = scmp.eq.s32.totalorder 0, 0
    // Predicated region
    $region18: #{tpu_custom_call.1} parent=1 // pred_check
      %p131 = pneg %p130
    $region19: #{tpu_custom_call.1} parent=1 // pred_check_branch
      %133 = sbr.rel (%p131) target = $region21
    $region20: #{tpu_custom_call.1} parent=1 // pred_region
      %134 = vst [vmem:[#allocation2] sm:$0xff] %v126
      %135 = vst [vmem:[#allocation2 + $0x8] sm:$0xff] %v128
    $region21: #{tpu_custom_call.1} parent=1 // pred_fallthru
      _
    %p136 = scmp.gt.s32.totalorder 0, 0
    // Predicated region
    $region22: #{tpu_custom_call.1} parent=1 // pred_check
      %p137 = pneg %p136
    $region23: #{tpu_custom_call.1} parent=1 // pred_check_branch
      %139 = sbr.rel (%p137) target = $region25
    $region24: #{tpu_custom_call.1} parent=1 // pred_region
      %v140 = vld [vmem:[#allocation2] sm:$0xff]
      %v141 = vld [vmem:[#allocation2 + $0x8] sm:$0xff]
      %v142 = vadd.f32 %v140, %v126
      %v143 = vadd.f32 %v141, %v128
      %144 = vst [vmem:[#allocation2] sm:$0xff] %v142
      %145 = vst [vmem:[#allocation2 + $0x8] sm:$0xff] %v143
    $region25: #{tpu_custom_call.1} parent=1 // pred_fallthru
      _
    // Predicated region
    $region26: #{tpu_custom_call.1} parent=1 // pred_check
      %p146 = pneg %p130
    $region27: #{tpu_custom_call.1} parent=1 // pred_check_branch
      %148 = sbr.rel (%p146) target = $region29
    $region28: #{tpu_custom_call.1} parent=1 // pred_region
      %v149 = vld [vmem:[#allocation2] sm:$0xff]
      %v150 = vld [vmem:[#allocation2 + $0x8] sm:$0xff]
      %v151 = vmax.f32 %v149, 0.0
      %v152 = vmax.f32 %v150, 0.0
      %153 = vst [vmem:[#allocation8] sm:$0xff] %v151
      %154 = vst [vmem:[#allocation8 + $0x8] sm:$0xff] %v152
    $region29: #{tpu_custom_call.1} parent=1 // pred_fallthru
      _
    // Predicated region
    $region30: #{tpu_custom_call.1} parent=1 // pred_check
      _
    $region31: #{tpu_custom_call.1} parent=1 // pred_check_branch
      %156 = sbr.rel (0) target = $region33
    $region32: #{tpu_custom_call.1} parent=1 // pred_region
      %158 = vsyncadd [#allocation5], 0
      %s159 = sshll.u32 [#allocation8], 4
      %s160 = int_to_ptr.vmem [resolvable:$true] %s159
      %s161 = sshll.u32 %s2, 4
      %s162 = int_to_ptr.hbm [resolvable:$true] %s161
      %167 = dma.vmem_to_hbm [thread:$0]  %s160, 256, %s162, [#allocation5], 128, 128, 8
    $region33: #{tpu_custom_call.1} parent=1 // pred_fallthru
      _
    // Predicated region
    $region34: #{tpu_custom_call.1} parent=1 // pred_check
      _
    $region35: #{tpu_custom_call.1} parent=1 // pred_check_branch
      %169 = sbr.rel (0) target = $region37
    $region36: #{tpu_custom_call.1} parent=1 // pred_region
      %171 = dma.done [#allocation5], 256
    $region37: #{tpu_custom_call.1} parent=1 // pred_fallthru
      _
    %172 = vsyncpa [#allocation4], 1
    %173 = vsyncpa [#allocation7], 1
    %174 = vsyncpa [#allocation5], 1

</llo_original>
